<compile_context>
chip_gen: v7x
topology: tpu7x:2x2x1
jax: 0.10.0
libtpu: 0.0.40
codegen_flags: <defaults>
</compile_context>

<pallas_src>
import jax
import jax.numpy as jnp
from jax.experimental import pallas as pl
from jax.experimental.pallas import tpu as pltpu
import numpy as np


def wavelet_upsample_kernel(x_ref, w_ref, b_ref, o_ref):
    # x_ref: (1, 1, 1, TH+2, KG)  halo input tile, KG = (G+2)*Cin, lanes = (col, chan)
    # w_ref: (3, KG, NG)          banded scatter weights, one slab per ky row tap
    # b_ref: (1, NG)              lane-placed bias
    # o_ref: (1, 1, TH, NG)       NG = 4*G*Cout lanes packed as (dy, j_local, dx, c)
    th = o_ref.shape[2]
    ng = o_ref.shape[3]

    # f32 accumulator initialized with the bias (no separate bias pass).
    acc = jnp.broadcast_to(b_ref[...].astype(jnp.float32), (th, ng))

    # Three MXU matmuls (one per kernel row).  The kx shift, wavelet quadrant
    # scatter and column interleave are all folded into w_ref's banded N
    # dimension, so the result comes out of the MXU already lane-dense.
    for ky in range(3):
        acc = acc + jnp.dot(x_ref[0, 0, 0, ky:ky + th, :], w_ref[ky],
                            preferred_element_type=jnp.float32)

    # Single fully dense (TH, NG) store.
    o_ref[0, 0] = acc.astype(o_ref.dtype)


def _auto_block_rows(h):
    if h <= 128:
        return h
    # Prefer a divisor of H in [128, 256] (multiple of 8) -> good MXU row use.
    for th in range(128, 257, 8):
        if h % th == 0:
            return th
    for th in range(120, 7, -8):
        if h % th == 0:
            return th
    return h


def _largest_divisor_leq(n, cap):
    for d in range(min(n, cap), 0, -1):
        if n % d == 0:
            return d
    return 1


def _round_up(x, m):
    return (x + m - 1) // m * m


def wavelet_upsample(x_nchw, weight, bias, *, scale_factor=2, block_rows=None,
                     group_cols=None, max_group_lanes=256,
                     compute_dtype=jnp.bfloat16, out_dtype=jnp.float32,
                     nhwc_out=False):
    """Pallas equivalent of WaveletUpsample.forward (scale_factor=2 only)."""
    assert scale_factor == 2, "wavelet pixel-shuffle is defined for 2x"
    B, cin, H, W = x_nchw.shape
    c4 = weight.shape[0]
    assert c4 % 4 == 0 and weight.shape[1] == cin
    cout = c4 // 4
    C = cout

    # ---- row tiling ---------------------------------------------------------
    TH = _auto_block_rows(H) if block_rows is None else int(block_rows)
    if block_rows is not None:
        assert TH >= 128 or H < 128, "row tile < 128 under-utilizes the MXU"
    assert H % TH == 0 and (TH == H or TH % 8 == 0)
    nT = H // TH

    # ---- column grouping (bounds scatter-weight size / MXU redundancy) ------
    if group_cols is None:
        G = _largest_divisor_leq(W, max(1, max_group_lanes // (4 * cout)))
    else:
        G = int(group_cols)
        assert W % G == 0
    nG = W // G
    NG = 4 * cout * G            # output lanes per group, packed (dy, j, dx, c)
    KG = (G + 2) * cin           # per-ky contraction size (group cols + halo)

    # ---- halo-tiled input: (B, nT, nG, TH+2, (G+2)*Cin); ~1x input HBM ------
    x_nhwc = jnp.transpose(x_nchw, (0, 2, 3, 1)).astype(compute_dtype)
    x_pad = jnp.pad(x_nhwc, ((0, 0), (1, 1), (1, 1), (0, 0)))
    xt = jnp.stack([x_pad[:, t * TH:t * TH + TH + 2] for t in range(nT)], axis=1)
    xt = jnp.stack([xt[:, :, :, g * G:g * G + G + 2, :] for g in range(nG)], axis=2)
    xt = xt.reshape(B, nT, nG, TH + 2, KG)

    # ---- banded scatter weights: (3, KG, NG), identical for every group -----
    # torch weight (4C, Cin, 3, 3) with channel q = 2*dy + dx (ll, lh, hl, hh).
    w_q = jnp.transpose(weight.astype(jnp.float32).reshape(2, 2, C, cin, 3, 3),
                        (4, 3, 0, 1, 2, 5))          # (ky, ci, dy, dx, co, kx)
    kx = jnp.arange(G + 2)[None, :] - jnp.arange(G)[:, None]      # jc - jl
    valid = ((kx >= 0) & (kx <= 2)).astype(jnp.float32)           # (G, G+2)
    gath = jnp.take(w_q, jnp.clip(kx, 0, 2).reshape(-1), axis=-1)
    gath = gath.reshape(3, cin, 2, 2, C, G, G + 2)
    gath = gath * valid[None, None, None, None, None]
    # -> (ky, jc, ci, dy, jl, dx, co) -> (3, (G+2)*Cin, 4*G*Cout)
    wband = jnp.transpose(gath, (0, 6, 1, 2, 5, 3, 4)).reshape(3, KG, NG)
    wband = wband.astype(compute_dtype)

    # lane-placed bias: lane = dy*(2*G*C) ... packed (dy, jl, dx, co)
    b_lane = jnp.broadcast_to(bias.astype(jnp.float32).reshape(2, 1, 2, C),
                              (2, G, 2, C)).reshape(1, NG)

    # ---- VMEM budget computed from actual tile sizes (v7x: keep < ~48 MiB) --
    isz_c = jnp.dtype(compute_dtype).itemsize
    isz_o = jnp.dtype(out_dtype).itemsize
    in_tile = _round_up(TH + 2, 16) * _round_up(KG, 128) * isz_c
    out_tile = _round_up(TH, 8) * _round_up(NG, 128) * isz_o
    w_bytes = 3 * _round_up(KG, 16) * _round_up(NG, 128) * isz_c
    b_bytes = _round_up(NG, 128) * 4
    acc_bytes = _round_up(TH, 8) * _round_up(NG, 128) * 4
    needed = 2 * (in_tile + out_tile + w_bytes + b_bytes) + acc_bytes + (4 << 20)
    vmem_limit = int(min(100 << 20, max(needed, 32 << 20)))

    out = pl.pallas_call(
        wavelet_upsample_kernel,
        out_shape=jax.ShapeDtypeStruct((B, nG, H, NG), out_dtype),
        grid_spec=pltpu.PrefetchScalarGridSpec(
            num_scalar_prefetch=0,
            grid=(B, nT, nG),
            in_specs=[
                pl.BlockSpec((1, 1, 1, TH + 2, KG),
                             lambda b, t, g: (b, t, g, 0, 0)),
                # constant index_maps -> weights / bias stay VMEM-resident
                pl.BlockSpec((3, KG, NG), lambda b, t, g: (0, 0, 0)),
                pl.BlockSpec((1, NG), lambda b, t, g: (0, 0)),
            ],
            out_specs=pl.BlockSpec((1, 1, TH, NG),
                                   lambda b, t, g: (b, g, t, 0)),
        ),
        compiler_params=pltpu.CompilerParams(
            dimension_semantics=("parallel", "parallel", "parallel"),
            vmem_limit_bytes=vmem_limit,
        ),
    )(xt, wband, b_lane)

    # out[b, g, i, dy*2GC + jl*2C + dx*C + c] = y[b, c, 2i+dy, 2*(g*G+jl)+dx].
    y = out.reshape(B, nG, H, 2, G, 2, cout)
    y = jnp.transpose(y, (0, 2, 3, 1, 4, 5, 6))   # no data movement when nG == 1
    y_nhwc = y.reshape(B, 2 * H, 2 * W, cout)     # free reshape (adjacent dims)
    if nhwc_out:
        return y_nhwc
    # NCHW only for consumers that need the torch layout (matches the module).
    return jnp.transpose(y_nhwc, (0, 3, 1, 2))


def reference_forward(x, weight, bias):
    """Plain-JAX reference matching the PyTorch module exactly (NCHW)."""
    out = jax.lax.conv_general_dilated(
        x.astype(jnp.float32), weight.astype(jnp.float32),
        window_strides=(1, 1), padding=((1, 1), (1, 1)),
        dimension_numbers=("NCHW", "OIHW", "NCHW"))
    out = out + bias.reshape(1, -1, 1, 1)
    B, c4, H, W = out.shape
    C = c4 // 4
    ll, lh = out[:, :C], out[:, C:2 * C]
    hl, hh = out[:, 2 * C:3 * C], out[:, 3 * C:]
    y = jnp.zeros((B, C, 2 * H, 2 * W), jnp.float32)
    y = y.at[:, :, 0::2, 0::2].set(ll)
    y = y.at[:, :, 0::2, 1::2].set(lh)
    y = y.at[:, :, 1::2, 0::2].set(hl)
    y = y.at[:, :, 1::2, 1::2].set(hh)
    return y


if __name__ == "__main__":
    # Small deterministic setup: batch=2, in_channels=4, out_channels=4, 16x16.
    B, in_channels, out_channels, H, W = 2, 4, 4, 16, 16

    key = jax.random.PRNGKey(0)
    kx, kw, kb = jax.random.split(key, 3)
    x = jax.random.normal(kx, (B, in_channels, H, W), dtype=jnp.float32)
    weight = 0.1 * jax.random.normal(
        kw, (out_channels * 4, in_channels, 3, 3), dtype=jnp.float32)
    bias = 0.1 * jax.random.normal(kb, (out_channels * 4,), dtype=jnp.float32)

    y_ref = jax.block_until_ready(reference_forward(x, weight, bias))

    # f32-operand path: numerically matches the conv reference.
    y_f32 = jax.block_until_ready(
        wavelet_upsample(x, weight, bias, compute_dtype=jnp.float32))
    assert y_f32.shape == (B, out_channels, 2 * H, 2 * W)
    np.testing.assert_allclose(np.asarray(y_f32), np.asarray(y_ref),
                               rtol=1e-4, atol=1e-4)

    # Default path: bf16 operands, f32 accumulation (MXU-native on v5e/v6e/v7x).
    y_bf16 = jax.block_until_ready(wavelet_upsample(x, weight, bias))
    np.testing.assert_allclose(np.asarray(y_bf16), np.asarray(y_ref),
                               rtol=5e-2, atol=5e-2)

    # Coverage for the multi-row-tile / multi-column-group path:
    # H=W=32 -> grid (B, 2 row tiles, 4 column groups).  Small tiles are only
    # used here because H < 128 (correctness coverage, not the perf default).
    x2 = jax.random.normal(jax.random.PRNGKey(1),
                           (B, in_channels, 32, 32), dtype=jnp.float32)
    y2_ref = jax.block_until_ready(reference_forward(x2, weight, bias))
    y2 = jax.block_until_ready(
        wavelet_upsample(x2, weight, bias, compute_dtype=jnp.float32,
                         block_rows=16, group_cols=8))
    np.testing.assert_allclose(np.asarray(y2), np.asarray(y2_ref),
                               rtol=1e-4, atol=1e-4)

    print("KERNEL_OK")
</pallas_src>

<mosaic_0001>
module attributes {stable_mosaic.version = 11 : i64} {
  func.func @wavelet_upsample_kernel(%arg0: i32, %arg1: i32, %arg2: i32, %arg3: memref<1x1x1x18x72xf32, #tpu.memory_space<vmem>>, %arg4: memref<3x72x256xf32, #tpu.memory_space<vmem>>, %arg5: memref<1x256xf32, #tpu.memory_space<vmem>>, %arg6: memref<1x1x16x256xf32, #tpu.memory_space<vmem>>) attributes {dimension_semantics = [#tpu.dimension_semantics<parallel>, #tpu.dimension_semantics<parallel>, #tpu.dimension_semantics<parallel>], iteration_bounds = array<i64: 2, 1, 1>, scalar_prefetch = 0 : i64, scratch_operands = 0 : i64, tpu.core_type = #tpu.core_type<tc>, window_params = [{transform_indices = @transform_0, window_bounds = array<i64: 1, 1, 1, 18, 72>}, {pipeline_mode = #tpu.pipeline_mode<synchronous>, transform_indices = @transform_1, window_bounds = array<i64: 3, 72, 256>}, {pipeline_mode = #tpu.pipeline_mode<synchronous>, transform_indices = @transform_2, window_bounds = array<i64: 1, 256>}, {transform_indices = @transform_3, window_bounds = array<i64: 1, 1, 16, 256>}]} {
    %c0 = arith.constant 0 : index
    %c0_0 = arith.constant 0 : index
    %0 = vector.load %arg5[%c0, %c0_0] : memref<1x256xf32, #tpu.memory_space<vmem>>, vector<1x256xf32>
    %1 = vector.shape_cast %0 : vector<1x256xf32> to vector<1x256xf32>
    %2 = vector.broadcast %1 : vector<1x256xf32> to vector<16x256xf32>
    %c0_1 = arith.constant 0 : index
    %c0_2 = arith.constant 0 : index
    %c0_3 = arith.constant 0 : index
    %c0_4 = arith.constant 0 : index
    %c0_5 = arith.constant 0 : index
    %3 = vector.load %arg3[%c0_1, %c0_2, %c0_3, %c0_4, %c0_5] : memref<1x1x1x18x72xf32, #tpu.memory_space<vmem>>, vector<1x1x1x16x72xf32>
    %4 = vector.shape_cast %3 : vector<1x1x1x16x72xf32> to vector<16x72xf32>
    %c0_6 = arith.constant 0 : index
    %c0_7 = arith.constant 0 : index
    %c0_8 = arith.constant 0 : index
    %5 = vector.load %arg4[%c0_6, %c0_7, %c0_8] : memref<3x72x256xf32, #tpu.memory_space<vmem>>, vector<1x72x256xf32>
    %6 = vector.shape_cast %5 : vector<1x72x256xf32> to vector<72x256xf32>
    %cst = arith.constant dense<0.000000e+00> : vector<16x256xf32>
    %7 = tpu.matmul %4, %6, %cst {dimension_numbers = #tpu.dot_dimension_numbers<[1], [0], [0], [1], [0, 0, 1, 1], [], []>} : vector<16x72xf32>, vector<72x256xf32>, vector<16x256xf32> -> vector<16x256xf32>
    %8 = arith.addf %2, %7 : vector<16x256xf32>
    %c0_9 = arith.constant 0 : index
    %c0_10 = arith.constant 0 : index
    %c0_11 = arith.constant 0 : index
    %c1 = arith.constant 1 : index
    %c0_12 = arith.constant 0 : index
    %9 = vector.load %arg3[%c0_9, %c0_10, %c0_11, %c1, %c0_12] : memref<1x1x1x18x72xf32, #tpu.memory_space<vmem>>, vector<1x1x1x16x72xf32>
    %10 = vector.shape_cast %9 : vector<1x1x1x16x72xf32> to vector<16x72xf32>
    %c1_13 = arith.constant 1 : index
    %c0_14 = arith.constant 0 : index
    %c0_15 = arith.constant 0 : index
    %11 = vector.load %arg4[%c1_13, %c0_14, %c0_15] : memref<3x72x256xf32, #tpu.memory_space<vmem>>, vector<1x72x256xf32>
    %12 = vector.shape_cast %11 : vector<1x72x256xf32> to vector<72x256xf32>
    %cst_16 = arith.constant dense<0.000000e+00> : vector<16x256xf32>
    %13 = tpu.matmul %10, %12, %cst_16 {dimension_numbers = #tpu.dot_dimension_numbers<[1], [0], [0], [1], [0, 0, 1, 1], [], []>} : vector<16x72xf32>, vector<72x256xf32>, vector<16x256xf32> -> vector<16x256xf32>
    %14 = arith.addf %8, %13 : vector<16x256xf32>
    %c0_17 = arith.constant 0 : index
    %c0_18 = arith.constant 0 : index
    %c0_19 = arith.constant 0 : index
    %c2 = arith.constant 2 : index
    %c0_20 = arith.constant 0 : index
    %15 = vector.load %arg3[%c0_17, %c0_18, %c0_19, %c2, %c0_20] : memref<1x1x1x18x72xf32, #tpu.memory_space<vmem>>, vector<1x1x1x16x72xf32>
    %16 = vector.shape_cast %15 : vector<1x1x1x16x72xf32> to vector<16x72xf32>
    %c2_21 = arith.constant 2 : index
    %c0_22 = arith.constant 0 : index
    %c0_23 = arith.constant 0 : index
    %17 = vector.load %arg4[%c2_21, %c0_22, %c0_23] : memref<3x72x256xf32, #tpu.memory_space<vmem>>, vector<1x72x256xf32>
    %18 = vector.shape_cast %17 : vector<1x72x256xf32> to vector<72x256xf32>
    %cst_24 = arith.constant dense<0.000000e+00> : vector<16x256xf32>
    %19 = tpu.matmul %16, %18, %cst_24 {dimension_numbers = #tpu.dot_dimension_numbers<[1], [0], [0], [1], [0, 0, 1, 1], [], []>} : vector<16x72xf32>, vector<72x256xf32>, vector<16x256xf32> -> vector<16x256xf32>
    %20 = arith.addf %14, %19 : vector<16x256xf32>
    %c0_25 = arith.constant 0 : index
    %c0_26 = arith.constant 0 : index
    %c0_27 = arith.constant 0 : index
    %c0_28 = arith.constant 0 : index
    %21 = vector.load %arg6[%c0_25, %c0_26, %c0_27, %c0_28] : memref<1x1x16x256xf32, #tpu.memory_space<vmem>>, vector<1x1x16x256xf32>
    %22 = vector.shape_cast %21 : vector<1x1x16x256xf32> to vector<16x256xf32>
    %23 = vector.shape_cast %20 : vector<16x256xf32> to vector<1x1x16x256xf32>
    tpu.vector_store %arg6[%c0_25, %c0_26, %c0_27, %c0_28], %23 {strides = array<i32>} : memref<1x1x16x256xf32, #tpu.memory_space<vmem>>, vector<1x1x16x256xf32>,
    return
  }
  func.func @transform_0(%arg0: i32, %arg1: i32, %arg2: i32) -> (i32, i32, i32, i32, i32) {
    %c0_i32 = arith.constant 0 : i32
    %c0_i32_0 = arith.constant 0 : i32
    %c0_i32_1 = arith.constant 0 : i32
    return %arg0, %arg1, %arg2, %c0_i32, %c0_i32_0 : i32, i32, i32, i32, i32
  }
  func.func @transform_1(%arg0: i32, %arg1: i32, %arg2: i32) -> (i32, i32, i32) {
    %c0_i32 = arith.constant 0 : i32
    %c0_i32_0 = arith.constant 0 : i32
    %c0_i32_1 = arith.constant 0 : i32
    %c0_i32_2 = arith.constant 0 : i32
    return %c0_i32, %c0_i32_0, %c0_i32_1 : i32, i32, i32
  }
  func.func @transform_2(%arg0: i32, %arg1: i32, %arg2: i32) -> (i32, i32) {
    %c0_i32 = arith.constant 0 : i32
    %c0_i32_0 = arith.constant 0 : i32
    %c0_i32_1 = arith.constant 0 : i32
    return %c0_i32, %c0_i32_0 : i32, i32
  }
  func.func @transform_3(%arg0: i32, %arg1: i32, %arg2: i32) -> (i32, i32, i32, i32) {
    %c0_i32 = arith.constant 0 : i32
    %c0_i32_0 = arith.constant 0 : i32
    return %arg0, %arg2, %arg1, %c0_i32 : i32, i32, i32, i32
  }
}

</mosaic_0001>

<llo_original>
// kernel: tpu_custom_call.1
$region0: #{tpu_custom_call.1}
  #allocation0 [shape = 'u32[]', space=smem, size = 0x4, offset = 0x4, fixed_abs, tag = 'smem constant byte address 0x4 - core index']
  #allocation1 [shape = 'u32[144,128]{1,0:T(1,128)}', space=vmem, size = 0x12000, scoped, tag = 'internal scratch']
  %s0 = inlined_call_operand.vmem [shape: f32[2,1,1,18,72], index: 0, kind: input, shape index: {}]
  %s1 = inlined_call_operand.hbm [shape: f32[3,72,256], index: 1, kind: input, shape index: {}]
  %s2 = inlined_call_operand.vmem [shape: f32[1,256], index: 2, kind: input, shape index: {}]
  %s3 = inlined_call_operand.hbm [shape: f32[2,1,16,256], index: 3, kind: output, shape index: {}]
  %s4 = sld [smem:[#allocation0]]
  $region49: #{tpu_custom_call.1} parent=0
    _
  %s6 = ssub.s32 1, %s4
  %s7 = scalar_select 0, %s6, %s4
  $region1: #{tpu_custom_call.1} parent=0
    #allocation2 [shape = 'u8[221184]{0}', space=vmem, size = 0x36000, scoped, tag = 'input window, operand 1, single buffered']
    #allocation3 [shape = 's32[2]{0}', space=sflag, size = 0x8, scoped, tag = 'scoped memory for tpu_custom_call.1']
    #allocation4 [shape = 's32[2]{0}', space=sflag, size = 0x8, scoped, tag = 'scoped memory for tpu_custom_call.1']
    #allocation5 [shape = 'u8[32768]{0}', space=vmem, size = 0x8000, scoped, tag = 'output window, operand 0']
    %8 = vsyncpa [#allocation3], 0
    %9 = vsyncpa [#allocation4], 0
    %s10 = scalar_lea.sflag [#allocation4], 1
    %11 = vsyncpa %s10, 0
    loop: start=0, step=1, limit=4
    $region2: #{tpu_custom_call.1} parent=1 // loop_pre_header
      _
    $region3: #{tpu_custom_call.1} parent=1 // loop_header
      %s13 = sphi 0, %s17
      %p14 = scmp.ge.s32.totalorder %s13, 4
      %s20 = sphi 0, %s39
      %s21 = sphi 0, %s35
      %s22 = sphi 0, %s31
      %s23 = sphi 0, %s20
      %s24 = sphi 0, %s21
      %s25 = sphi 0, %s22
      %s26 = sphi 0, %s23
      %s27 = sphi 0, %s24
      %s28 = sphi 0, %s25
      %s46 = sphi 0, %s48
      %s49 = sphi 0, %s46
      %s50 = sphi 0, %s49
      %s66 = sphi 0, %s50
      %s70 = sphi 0, %s70
      %s72 = sphi 0, %s70
      %s73 = sphi 0, %s72
      %s87 = sphi 0, %s73
      %s91 = sphi 0, %s91
      %s93 = sphi 0, %s91
      %s94 = sphi 0, %s93
      %s108 = sphi 0, %s94
      %s118 = sphi 0, %s120
      %s121 = sphi 0, %s118
      %s122 = sphi 0, %s121
      %s138 = sphi 0, %s122
    $region4: #{tpu_custom_call.1} parent=1 // loop_header_branch
      %16 = sbr.rel (%p14) target = $region8
    $region5: #{tpu_custom_call.1} parent=1 // loop_body
      %s18 = ssub.s32 %s13, 1
      %s19 = ssub.s32 %s13, 2
      %s29 = sadd.s32 1, %s22
      %p30 = scmp.ge.s32.totalorder %s29, 1
      %s31 = scalar_select %p30, 0, %s29
      %s32 = sadd.s32 1, %s21
      %s33 = scalar_select %p30, %s32, %s21
      %p34 = scmp.ge.s32.totalorder %s33, 1
      %s35 = scalar_select %p34, 0, %s33
      %s36 = sadd.s32 1, %s20
      %s37 = scalar_select %p34, %s36, %s20
      %p38 = scmp.ge.s32.totalorder %s37, 2
      %s39 = scalar_select %p38, 0, %s37
      %s40 = ssub.s32 %s20, %s39
      %s41 = ssub.s32 %s21, %s35
      %s42 = sor.u32 %s40, %s41
      %s43 = ssub.s32 %s22, %s31
      %s44 = sor.u32 %s42, %s43
      %p45 = scmp.eq.s32.totalorder %s44, 0
      %s47 = sadd.s32 %s46, 1
      %s48 = scalar_select %p45, %s46, %s47
      %p51 = pneg %p45
      %p52 = scmp.eq.s32.totalorder %s13, 1
      %p53 = por %p51, %p52
      %p54 = scmp.ne.s32.totalorder %s46, %s49
      %p55 = scmp.eq.s32.totalorder %s13, 0
      %p56 = por %p54, %p55
      %p57 = scmp.ne.s32.totalorder %s46, %s49
      %p58 = scmp.eq.s32.totalorder %s18, 1
      %p59 = por %p57, %p58
      %p60 = scmp.ne.s32.totalorder %s49, %s50
      %p61 = scmp.eq.s32.totalorder %s18, 0
      %p62 = por %p60, %p61
      %p63 = scmp.ne.s32.totalorder %s49, %s50
      %p64 = scmp.eq.s32.totalorder %s19, 1
      %p65 = por %p63, %p64
      %p67 = scmp.ne.s32.totalorder %s50, %s66
      %p68 = scmp.eq.s32.totalorder %s19, 0
      %p69 = por %p67, %p68
      %s71 = sadd.s32 %s70, 1
      %p74 = scmp.eq.s32.totalorder %s13, 1
      %p75 = scmp.ne.s32.totalorder %s70, %s72
      %p76 = scmp.eq.s32.totalorder %s13, 0
      %p77 = por %p75, %p76
      %p78 = scmp.ne.s32.totalorder %s70, %s72
      %p79 = scmp.eq.s32.totalorder %s18, 1
      %p80 = por %p78, %p79
      %p81 = scmp.ne.s32.totalorder %s72, %s73
      %p82 = scmp.eq.s32.totalorder %s18, 0
      %p83 = por %p81, %p82
      %p84 = scmp.ne.s32.totalorder %s72, %s73
      %p85 = scmp.eq.s32.totalorder %s19, 1
      %p86 = por %p84, %p85
      %p88 = scmp.ne.s32.totalorder %s73, %s87
      %p89 = scmp.eq.s32.totalorder %s19, 0
      %p90 = por %p88, %p89
      %s92 = sadd.s32 %s91, 1
      %p95 = scmp.eq.s32.totalorder %s13, 1
      %p96 = scmp.ne.s32.totalorder %s91, %s93
      %p97 = scmp.eq.s32.totalorder %s13, 0
      %p98 = por %p96, %p97
      %p99 = scmp.ne.s32.totalorder %s91, %s93
      %p100 = scmp.eq.s32.totalorder %s18, 1
      %p101 = por %p99, %p100
      %p102 = scmp.ne.s32.totalorder %s93, %s94
      %p103 = scmp.eq.s32.totalorder %s18, 0
      %p104 = por %p102, %p103
      %p105 = scmp.ne.s32.totalorder %s93, %s94
      %p106 = scmp.eq.s32.totalorder %s19, 1
      %p107 = por %p105, %p106
      %p109 = scmp.ne.s32.totalorder %s94, %s108
      %p110 = scmp.eq.s32.totalorder %s19, 0
      %p111 = por %p109, %p110
      %s112 = ssub.s32 %s20, %s39
      %s113 = ssub.s32 %s22, %s31
      %s114 = sor.u32 %s112, %s113
      %s115 = ssub.s32 %s21, %s35
      %s116 = sor.u32 %s114, %s115
      %p117 = scmp.eq.s32.totalorder %s116, 0
      %s119 = sadd.s32 %s118, 1
      %s120 = scalar_select %p117, %s118, %s119
      %p123 = pneg %p117
      %p124 = scmp.eq.s32.totalorder %s13, 1
      %p125 = por %p123, %p124
      %p126 = scmp.ne.s32.totalorder %s118, %s121
      %p127 = scmp.eq.s32.totalorder %s13, 0
      %p128 = por %p126, %p127
      %p129 = scmp.ne.s32.totalorder %s118, %s121
      %p130 = scmp.eq.s32.totalorder %s18, 1
      %p131 = por %p129, %p130
      %p132 = scmp.ne.s32.totalorder %s121, %s122
      %p133 = scmp.eq.s32.totalorder %s18, 0
      %p134 = por %p132, %p133
      %p135 = scmp.ne.s32.totalorder %s121, %s122
      %p136 = scmp.eq.s32.totalorder %s19, 1
      %p137 = por %p135, %p136
      %p139 = scmp.ne.s32.totalorder %s122, %s138
      %p140 = scmp.eq.s32.totalorder %s19, 0
      %p141 = por %p139, %p140
      %p142 = scmp.le.s32.totalorder 1, %s13
      %p143 = scmp.lt.s32.totalorder %s13, 3
      %p144 = pnand %p142, %p143
      %p145 = pneg %p144
      // Predicated region
      $region9: #{tpu_custom_call.1} parent=5 // pred_check
        _
      $region10: #{tpu_custom_call.1} parent=5 // pred_check_branch
        %147 = sbr.rel (%p144) target = $region12
      $region11: #{tpu_custom_call.1} parent=5 // pred_region
        %s148 = ssub.s32 %s13, 1
        // Predicated region
        $region13: #{tpu_custom_call.1} parent=11 // pred_check
          %p149 = pneg %p83
        $region14: #{tpu_custom_call.1} parent=11 // pred_check_branch
          %151 = sbr.rel (%p149) target = $region16
        $region15: #{tpu_custom_call.1} parent=11 // pred_region
          %s153 = ssub.s32 6912, 6912
          %154 = vsyncadd [#allocation3], %s153
          %s155 = sshll.u32 [#allocation2], 4
          %s156 = int_to_ptr.vmem [resolvable:$true] %s155
          %161 = dma.hbm_to_vmem [thread:$0]  %s1, 6912, %s156, [#allocation3], 256, 256, 16
        $region16: #{tpu_custom_call.1} parent=11 // pred_fallthru
          _
        // Predicated region
        $region17: #{tpu_custom_call.1} parent=11 // pred_check
          %p162 = pneg %p104
        $region18: #{tpu_custom_call.1} parent=11 // pred_check_branch
          %164 = sbr.rel (%p162) target = $region20
        $region19: #{tpu_custom_call.1} parent=11 // pred_region
          _
        $region20: #{tpu_custom_call.1} parent=11 // pred_fallthru
          _
      $region12: #{tpu_custom_call.1} parent=5 // pred_fallthru
        _
      %p165 = scmp.lt.s32.totalorder %s13, 2
      // Predicated region
      $region21: #{tpu_custom_call.1} parent=5 // pred_check
        %p166 = pneg %p165
      $region22: #{tpu_custom_call.1} parent=5 // pred_check_branch
        %168 = sbr.rel (%p166) target = $region24
      $region23: #{tpu_custom_call.1} parent=5 // pred_region
        // Predicated region
        $region25: #{tpu_custom_call.1} parent=23 // pred_check
          %p169 = pneg %p56
        $region26: #{tpu_custom_call.1} parent=23 // pred_check_branch
          %171 = sbr.rel (%p169) target = $region28
        $region27: #{tpu_custom_call.1} parent=23 // pred_region
          %p172 = scmp.lt.s32.totalorder %s20, 1
          %s173 = scalar_select %p172, %s20, 1
          %p174 = scmp.lt.s32.totalorder %s21, 0
          %s175 = scalar_select %p174, %s21, 0
          %p176 = scmp.lt.s32.totalorder %s22, 0
          %s177 = scalar_select %p176, %s22, 0
          %s178 = smul.addr %s177, 3
          %s179 = smul.addr %s175, 3
          %s180 = sadd.s32 %s178, %s179
          %s181 = smul.addr %s173, 3
          %s182 = sadd.s32 %s180, %s181
          %s183 = smul.addr %s182, 8
          %s184 = scalar_lea.vmem %s0, %s183
        $region28: #{tpu_custom_call.1} parent=23 // pred_fallthru
          _
      $region24: #{tpu_custom_call.1} parent=5 // pred_fallthru
        _
      %p185 = scmp.le.s32.totalorder 1, %s13
      %p186 = scmp.lt.s32.totalorder %s13, 3
      %p187 = pnand %p185, %p186
      %p188 = pneg %p187
      // Predicated region
      $region29: #{tpu_custom_call.1} parent=5 // pred_check
        _
      $region30: #{tpu_custom_call.1} parent=5 // pred_check_branch
        %190 = sbr.rel (%p187) target = $region32
      $region31: #{tpu_custom_call.1} parent=5 // pred_region
        %s191 = ssub.s32 %s13, 1
        // Predicated region
        $region33: #{tpu_custom_call.1} parent=31 // pred_check
          %p192 = pneg %p83
        $region34: #{tpu_custom_call.1} parent=31 // pred_check_branch
          %194 = sbr.rel (%p192) target = $region36
        $region35: #{tpu_custom_call.1} parent=31 // pred_region
          %195 = dma.done [#allocation3], 6912
        $region36: #{tpu_custom_call.1} parent=31 // pred_fallthru
          _
        %p196 = scmp.lt.s32.totalorder %s23, 1
        %s197 = scalar_select %p196, %s23, 1
        %p198 = scmp.lt.s32.totalorder %s24, 0
        %s199 = scalar_select %p198, %s24, 0
        %p200 = scmp.lt.s32.totalorder %s25, 0
        %s201 = scalar_select %p200, %s25, 0
        %s202 = smul.addr %s201, 3
        %s203 = smul.addr %s199, 3
        %s204 = sadd.s32 %s202, %s203
        %s205 = smul.addr %s197, 3
        %s206 = sadd.s32 %s204, %s205
        %s207 = smul.addr %s206, 8
        %s208 = scalar_lea.vmem %s0, %s207
        %p209 = pneg %p62
        %p210 = pneg %p59
        %p211 = pneg %p83
        %p212 = pneg %p80
        %p213 = pneg %p104
        %p214 = pneg %p101
        %p215 = pneg %p134
        %p216 = pneg %p131
        %s217 = sand.u32 %s121, 1
        %s218 = scalar_lea.sflag [#allocation4], %s217
        %s219 = sand.u32 %s121, 1
        %s220 = smul.addr %s219, 32
        %s221 = scalar_lea.vmem [#allocation5], %s220
        %p222 = scmp.lt.s32.totalorder %s23, 1
        %s223 = scalar_select %p222, %s23, 1
        %p224 = scmp.lt.s32.totalorder %s24, 0
        %s225 = scalar_select %p224, %s24, 0
        %p226 = scmp.lt.s32.totalorder %s25, 0
        %s227 = scalar_select %p226, %s25, 0
        %s228 = smul.addr %s227, 3
        %s229 = smul.addr %s225, 3
        %s230 = sadd.s32 %s228, %s229
        %s231 = smul.addr %s223, 3
        %s232 = sadd.s32 %s230, %s231
        %s233 = smul.addr %s232, 8
        %s234 = scalar_lea.vmem %s0, %s233
        %s235 = smul.u32 2, %s24
        %v236 = vld [vmem:[%s2] sm:$0x3]
        %v238 = vlaneseq
        %v239 = vshrl.u32 %v238, 7
        %v240 = vsub.s32 0, %v239
        %v241 = vrot.slane %v236, %v240
        %v242 = vlaneseq
        %v243 = vshrl.u32 %v242, 7
        %v244 = vsub.s32 1, %v243
        %v245 = vrot.slane %v236, %v244
        %v248 = vld [vmem:[%s234] sm:$0xff]
        %v249 = vld [vmem:[%s234 + $0x8] sm:$0xff]
        %v250 = vld [vmem:[#allocation2] sm:$0xff]
        %v251 = vld [vmem:[#allocation2 + $0x8] sm:$0xff]
        %v252 = vld [vmem:[#allocation2 + $0x10] sm:$0xff]
        %v253 = vld [vmem:[#allocation2 + $0x18] sm:$0xff]
        %v254 = vld [vmem:[#allocation2 + $0x20] sm:$0xff]
        %v255 = vld [vmem:[#allocation2 + $0x28] sm:$0xff]
        %v256 = vld [vmem:[#allocation2 + $0x30] sm:$0xff]
        %v257 = vld [vmem:[#allocation2 + $0x38] sm:$0xff]
        %v258 = vld [vmem:[#allocation2 + $0x40] sm:$0xff]
        %v259 = vld [vmem:[#allocation2 + $0x48] sm:$0xff]
        %v260 = vld [vmem:[#allocation2 + $0x50] sm:$0xff]
        %v261 = vld [vmem:[#allocation2 + $0x58] sm:$0xff]
        %v262 = vld [vmem:[#allocation2 + $0x60] sm:$0xff]
        %v263 = vld [vmem:[#allocation2 + $0x68] sm:$0xff]
        %v264 = vld [vmem:[#allocation2 + $0x70] sm:$0xff]
        %v265 = vld [vmem:[#allocation2 + $0x78] sm:$0xff]
        %v266 = vld [vmem:[#allocation2 + $0x80] sm:$0xff]
        %v267 = vld [vmem:[#allocation2 + $0x88] sm:$0xff]
        %vm268 = vcmask 588800
        %v270 = vsel %vm268, %v248, 0
        %v273 = vsel %vm268, %v249, 0
        %275 = vmatprep.subr.mxu0 %v251
        %276 = vmatpush1.msra.mxu0 %v250
        %277 = vmatprep.subr.mxu0 %v253
        %278 = vmatpush1.msra.mxu0 %v252
        %279 = vmatprep.subr.mxu0 %v255
        %280 = vmatpush1.msra.mxu0 %v254
        %281 = vmatprep.subr.mxu0 %v257
        %282 = vmatpush1.msra.mxu0 %v256
        %283 = vmatprep.subr.mxu0 %v259
        %284 = vmatpush1.msra.mxu0 %v258
        %285 = vmatprep.subr.mxu0 %v261
        %286 = vmatpush1.msra.mxu0 %v260
        %287 = vmatprep.subr.mxu0 %v263
        %288 = vmatpush1.msra.mxu0 %v262
        %289 = vmatprep.subr.mxu0 %v265
        %290 = vmatpush1.msra.mxu0 %v264
        %291 = vmatprep.subr.mxu0 %v267
        %292 = vmatpush1.msra.mxu0 %v266
        %293 = vmatprep.subr.mxu0 0.0
        %294 = vmatpush1.msra.mxu0 0.0
        %295 = vmatprep.subr.mxu0 0.0
        %296 = vmatpush1.msra.mxu0 0.0
        %297 = vmatprep.subr.mxu0 0.0
        %298 = vmatpush1.msra.mxu0 0.0
        %299 = vmatprep.subr.mxu0 0.0
        %300 = vmatpush1.msra.mxu0 0.0
        %301 = vmatprep.subr.mxu0 0.0
        %302 = vmatpush1.msra.mxu0 0.0
        %303 = vmatprep.subr.mxu0 0.0
        %304 = vmatpush1.msra.mxu0 0.0
        %305 = vmatprep.subr.mxu0 0.0
        %306 = vmatpush1.msra.mxu0 0.0
        %307 = vmatprep.subr.mxu0 0.0
        %308 = vmatpush1.msra.mxu0 0.0
        %309 = vmatprep.subr.mxu0 0.0
        %310 = vmatpush1.msra.mxu0 0.0
        %311 = vmatprep.subr.mxu0 0.0
        %312 = vmatpush1.msra.mxu0 0.0
        %313 = vmatprep.subr.mxu0 0.0
        %314 = vmatpush1.msra.mxu0 0.0
        %315 = vmatprep.subr.mxu0 0.0
        %316 = vmatpush1.msra.mxu0 0.0
        %317 = vmatprep.subr.mxu0 0.0
        %318 = vmatpush1.msra.mxu0 0.0
        %319 = vmatprep.subr.mxu0 0.0
        %320 = vmatpush1.msra.mxu0 0.0
        %321 = vmatprep.subr.mxu0 0.0
        %322 = vmatpush1.msra.mxu0 0.0
        %323 = vmatprep.subr.mxu0 0.0
        %324 = vmatpush1.msra.mxu0 0.0
        %325 = vmatprep.subr.mxu0 0.0
        %326 = vmatpush1.msra.mxu0 0.0
        %327 = vmatprep.subr.mxu0 0.0
        %328 = vmatpush1.msra.mxu0 0.0
        %329 = vmatprep.subr.mxu0 0.0
        %330 = vmatpush1.msra.mxu0 0.0
        %331 = vmatprep.subr.mxu0 0.0
        %332 = vmatpush1.msra.mxu0 0.0
        %333 = vmatprep.subr.mxu0 0.0
        %334 = vmatpush1.msra.mxu0 0.0
        %335 = vmatprep.subr.mxu0 0.0
        %336 = vmatpush1.msra.mxu0 0.0
        %337 = vmatprep.subr.mxu0 0.0
        %338 = vmatpush1.msra.mxu0 0.0
        %339 = vmatprep.mubr.f32.mxu0 0.0
        %340 = vmatmul.mubr.f32.gmra.mrb[0].mxu0 %v270
        %v341 = vpop.f32.mrb[0].mxu0
        %v342 = vadd.f32 0.0, %v341
        %v343 = vpop.f32.mrb[0].mxu0
        %v344 = vadd.f32 0.0, %v343
        %345 = vmatprep.mubr.f32.mxu0 0.0
        %346 = vmatmul.mubr.f32.gmra.mrb[0].mxu0 %v273
        %v347 = vpop.f32.mrb[0].mxu0
        %v348 = vadd.f32 0.0, %v347
        %v349 = vpop.f32.mrb[0].mxu0
        %v350 = vadd.f32 0.0, %v349
        %351 = vdwg.mxu0
        %v352 = vadd.f32 %v241, %v342
        %v353 = vadd.f32 %v245, %v344
        %v354 = vadd.f32 %v241, %v348
        %v355 = vadd.f32 %v245, %v350
        %v356 = vld [vmem:[%s234 + $0x1] sm:$0xff]
        %v357 = vld [vmem:[%s234 + $0x9] sm:$0xff]
        %s358 = scalar_lea.vmem [#allocation2], 144
        %v359 = vld [vmem:[%s358] sm:$0xff]
        %v360 = vld [vmem:[%s358 + $0x8] sm:$0xff]
        %v361 = vld [vmem:[%s358 + $0x10] sm:$0xff]
        %v362 = vld [vmem:[%s358 + $0x18] sm:$0xff]
        %v363 = vld [vmem:[%s358 + $0x20] sm:$0xff]
        %v364 = vld [vmem:[%s358 + $0x28] sm:$0xff]
        %v365 = vld [vmem:[%s358 + $0x30] sm:$0xff]
        %v366 = vld [vmem:[%s358 + $0x38] sm:$0xff]
        %v367 = vld [vmem:[%s358 + $0x40] sm:$0xff]
        %v368 = vld [vmem:[%s358 + $0x48] sm:$0xff]
        %v369 = vld [vmem:[%s358 + $0x50] sm:$0xff]
        %v370 = vld [vmem:[%s358 + $0x58] sm:$0xff]
        %v371 = vld [vmem:[%s358 + $0x60] sm:$0xff]
        %v372 = vld [vmem:[%s358 + $0x68] sm:$0xff]
        %v373 = vld [vmem:[%s358 + $0x70] sm:$0xff]
        %v374 = vld [vmem:[%s358 + $0x78] sm:$0xff]
        %v375 = vld [vmem:[%s358 + $0x80] sm:$0xff]
        %v376 = vld [vmem:[%s358 + $0x88] sm:$0xff]
        %v378 = vsel %vm268, %v356, 0
        %v381 = vsel %vm268, %v357, 0
        %383 = vmatprep.subr.mxu0 %v360
        %384 = vmatpush1.msra.mxu0 %v359
        %385 = vmatprep.subr.mxu0 %v362
        %386 = vmatpush1.msra.mxu0 %v361
        %387 = vmatprep.subr.mxu0 %v364
        %388 = vmatpush1.msra.mxu0 %v363
        %389 = vmatprep.subr.mxu0 %v366
        %390 = vmatpush1.msra.mxu0 %v365
        %391 = vmatprep.subr.mxu0 %v368
        %392 = vmatpush1.msra.mxu0 %v367
        %393 = vmatprep.subr.mxu0 %v370
        %394 = vmatpush1.msra.mxu0 %v369
        %395 = vmatprep.subr.mxu0 %v372
        %396 = vmatpush1.msra.mxu0 %v371
        %397 = vmatprep.subr.mxu0 %v374
        %398 = vmatpush1.msra.mxu0 %v373
        %399 = vmatprep.subr.mxu0 %v376
        %400 = vmatpush1.msra.mxu0 %v375
        %401 = vmatprep.subr.mxu0 0.0
        %402 = vmatpush1.msra.mxu0 0.0
        %403 = vmatprep.subr.mxu0 0.0
        %404 = vmatpush1.msra.mxu0 0.0
        %405 = vmatprep.subr.mxu0 0.0
        %406 = vmatpush1.msra.mxu0 0.0
        %407 = vmatprep.subr.mxu0 0.0
        %408 = vmatpush1.msra.mxu0 0.0
        %409 = vmatprep.subr.mxu0 0.0
        %410 = vmatpush1.msra.mxu0 0.0
        %411 = vmatprep.subr.mxu0 0.0
        %412 = vmatpush1.msra.mxu0 0.0
        %413 = vmatprep.subr.mxu0 0.0
        %414 = vmatpush1.msra.mxu0 0.0
        %415 = vmatprep.subr.mxu0 0.0
        %416 = vmatpush1.msra.mxu0 0.0
        %417 = vmatprep.subr.mxu0 0.0
        %418 = vmatpush1.msra.mxu0 0.0
        %419 = vmatprep.subr.mxu0 0.0
        %420 = vmatpush1.msra.mxu0 0.0
        %421 = vmatprep.subr.mxu0 0.0
        %422 = vmatpush1.msra.mxu0 0.0
        %423 = vmatprep.subr.mxu0 0.0
        %424 = vmatpush1.msra.mxu0 0.0
        %425 = vmatprep.subr.mxu0 0.0
        %426 = vmatpush1.msra.mxu0 0.0
        %427 = vmatprep.subr.mxu0 0.0
        %428 = vmatpush1.msra.mxu0 0.0
        %429 = vmatprep.subr.mxu0 0.0
        %430 = vmatpush1.msra.mxu0 0.0
        %431 = vmatprep.subr.mxu0 0.0
        %432 = vmatpush1.msra.mxu0 0.0
        %433 = vmatprep.subr.mxu0 0.0
        %434 = vmatpush1.msra.mxu0 0.0
        %435 = vmatprep.subr.mxu0 0.0
        %436 = vmatpush1.msra.mxu0 0.0
        %437 = vmatprep.subr.mxu0 0.0
        %438 = vmatpush1.msra.mxu0 0.0
        %439 = vmatprep.subr.mxu0 0.0
        %440 = vmatpush1.msra.mxu0 0.0
        %441 = vmatprep.subr.mxu0 0.0
        %442 = vmatpush1.msra.mxu0 0.0
        %443 = vmatprep.subr.mxu0 0.0
        %444 = vmatpush1.msra.mxu0 0.0
        %445 = vmatprep.subr.mxu0 0.0
        %446 = vmatpush1.msra.mxu0 0.0
        %447 = vmatprep.mubr.f32.mxu0 0.0
        %448 = vmatmul.mubr.f32.gmra.mrb[0].mxu0 %v378
        %v449 = vpop.f32.mrb[0].mxu0
        %v450 = vadd.f32 0.0, %v449
        %v451 = vpop.f32.mrb[0].mxu0
        %v452 = vadd.f32 0.0, %v451
        %453 = vmatprep.mubr.f32.mxu0 0.0
        %454 = vmatmul.mubr.f32.gmra.mrb[0].mxu0 %v381
        %v455 = vpop.f32.mrb[0].mxu0
        %v456 = vadd.f32 0.0, %v455
        %v457 = vpop.f32.mrb[0].mxu0
        %v458 = vadd.f32 0.0, %v457
        %459 = vdwg.mxu0
        %v460 = vadd.f32 %v352, %v450
        %v461 = vadd.f32 %v353, %v452
        %v462 = vadd.f32 %v354, %v456
        %v463 = vadd.f32 %v355, %v458
        %v464 = vld [vmem:[%s234 + $0x2] sm:$0xff]
        %v465 = vld [vmem:[%s234 + $0xa] sm:$0xff]
        %s466 = scalar_lea.vmem [#allocation2], 288
        %v467 = vld [vmem:[%s466] sm:$0xff]
        %v468 = vld [vmem:[%s466 + $0x8] sm:$0xff]
        %v469 = vld [vmem:[%s466 + $0x10] sm:$0xff]
        %v470 = vld [vmem:[%s466 + $0x18] sm:$0xff]
        %v471 = vld [vmem:[%s466 + $0x20] sm:$0xff]
        %v472 = vld [vmem:[%s466 + $0x28] sm:$0xff]
        %v473 = vld [vmem:[%s466 + $0x30] sm:$0xff]
        %v474 = vld [vmem:[%s466 + $0x38] sm:$0xff]
        %v475 = vld [vmem:[%s466 + $0x40] sm:$0xff]
        %v476 = vld [vmem:[%s466 + $0x48] sm:$0xff]
        %v477 = vld [vmem:[%s466 + $0x50] sm:$0xff]
        %v478 = vld [vmem:[%s466 + $0x58] sm:$0xff]
        %v479 = vld [vmem:[%s466 + $0x60] sm:$0xff]
        %v480 = vld [vmem:[%s466 + $0x68] sm:$0xff]
        %v481 = vld [vmem:[%s466 + $0x70] sm:$0xff]
        %v482 = vld [vmem:[%s466 + $0x78] sm:$0xff]
        %v483 = vld [vmem:[%s466 + $0x80] sm:$0xff]
        %v484 = vld [vmem:[%s466 + $0x88] sm:$0xff]
        %v486 = vsel %vm268, %v464, 0
        %v489 = vsel %vm268, %v465, 0
        %491 = vmatprep.subr.mxu0 %v468
        %492 = vmatpush1.msra.mxu0 %v467
        %493 = vmatprep.subr.mxu0 %v470
        %494 = vmatpush1.msra.mxu0 %v469
        %495 = vmatprep.subr.mxu0 %v472
        %496 = vmatpush1.msra.mxu0 %v471
        %497 = vmatprep.subr.mxu0 %v474
        %498 = vmatpush1.msra.mxu0 %v473
        %499 = vmatprep.subr.mxu0 %v476
        %500 = vmatpush1.msra.mxu0 %v475
        %501 = vmatprep.subr.mxu0 %v478
        %502 = vmatpush1.msra.mxu0 %v477
        %503 = vmatprep.subr.mxu0 %v480
        %504 = vmatpush1.msra.mxu0 %v479
        %505 = vmatprep.subr.mxu0 %v482
        %506 = vmatpush1.msra.mxu0 %v481
        %507 = vmatprep.subr.mxu0 %v484
        %508 = vmatpush1.msra.mxu0 %v483
        %509 = vmatprep.subr.mxu0 0.0
        %510 = vmatpush1.msra.mxu0 0.0
        %511 = vmatprep.subr.mxu0 0.0
        %512 = vmatpush1.msra.mxu0 0.0
        %513 = vmatprep.subr.mxu0 0.0
        %514 = vmatpush1.msra.mxu0 0.0
        %515 = vmatprep.subr.mxu0 0.0
        %516 = vmatpush1.msra.mxu0 0.0
        %517 = vmatprep.subr.mxu0 0.0
        %518 = vmatpush1.msra.mxu0 0.0
        %519 = vmatprep.subr.mxu0 0.0
        %520 = vmatpush1.msra.mxu0 0.0
        %521 = vmatprep.subr.mxu0 0.0
        %522 = vmatpush1.msra.mxu0 0.0
        %523 = vmatprep.subr.mxu0 0.0
        %524 = vmatpush1.msra.mxu0 0.0
        %525 = vmatprep.subr.mxu0 0.0
        %526 = vmatpush1.msra.mxu0 0.0
        %527 = vmatprep.subr.mxu0 0.0
        %528 = vmatpush1.msra.mxu0 0.0
        %529 = vmatprep.subr.mxu0 0.0
        %530 = vmatpush1.msra.mxu0 0.0
        %531 = vmatprep.subr.mxu0 0.0
        %532 = vmatpush1.msra.mxu0 0.0
        %533 = vmatprep.subr.mxu0 0.0
        %534 = vmatpush1.msra.mxu0 0.0
        %535 = vmatprep.subr.mxu0 0.0
        %536 = vmatpush1.msra.mxu0 0.0
        %537 = vmatprep.subr.mxu0 0.0
        %538 = vmatpush1.msra.mxu0 0.0
        %539 = vmatprep.subr.mxu0 0.0
        %540 = vmatpush1.msra.mxu0 0.0
        %541 = vmatprep.subr.mxu0 0.0
        %542 = vmatpush1.msra.mxu0 0.0
        %543 = vmatprep.subr.mxu0 0.0
        %544 = vmatpush1.msra.mxu0 0.0
        %545 = vmatprep.subr.mxu0 0.0
        %546 = vmatpush1.msra.mxu0 0.0
        %547 = vmatprep.subr.mxu0 0.0
        %548 = vmatpush1.msra.mxu0 0.0
        %549 = vmatprep.subr.mxu0 0.0
        %550 = vmatpush1.msra.mxu0 0.0
        %551 = vmatprep.subr.mxu0 0.0
        %552 = vmatpush1.msra.mxu0 0.0
        %553 = vmatprep.subr.mxu0 0.0
        %554 = vmatpush1.msra.mxu0 0.0
        %555 = vmatprep.mubr.f32.mxu0 0.0
        %556 = vmatmul.mubr.f32.gmra.mrb[0].mxu0 %v486
        %v557 = vpop.f32.mrb[0].mxu0
        %v558 = vadd.f32 0.0, %v557
        %v559 = vpop.f32.mrb[0].mxu0
        %v560 = vadd.f32 0.0, %v559
        %561 = vmatprep.mubr.f32.mxu0 0.0
        %562 = vmatmul.mubr.f32.gmra.mrb[0].mxu0 %v489
        %v563 = vpop.f32.mrb[0].mxu0
        %v564 = vadd.f32 0.0, %v563
        %v565 = vpop.f32.mrb[0].mxu0
        %v566 = vadd.f32 0.0, %v565
        %567 = vdwg.mxu0
        %v568 = vadd.f32 %v460, %v558
        %v569 = vadd.f32 %v461, %v560
        %v570 = vadd.f32 %v462, %v564
        %v571 = vadd.f32 %v463, %v566
        %572 = vst [vmem:[%s221] sm:$0xff] %v568
        %573 = vst [vmem:[%s221 + $0x8] sm:$0xff] %v569
        %574 = vst [vmem:[%s221 + $0x10] sm:$0xff] %v570
        %575 = vst [vmem:[%s221 + $0x18] sm:$0xff] %v571
        %s576 = sand.u32 %s121, 1
        %s577 = scalar_lea.sflag [#allocation4], %s576
        %s578 = sand.u32 %s121, 1
        %s579 = smul.addr %s578, 32
        %s580 = scalar_lea.vmem [#allocation5], %s579
        // Predicated region
        $region37: #{tpu_custom_call.1} parent=31 // pred_check
          %p581 = pneg %p131
        $region38: #{tpu_custom_call.1} parent=31 // pred_check_branch
          %583 = sbr.rel (%p581) target = $region40
        $region39: #{tpu_custom_call.1} parent=31 // pred_region
          %s584 = smul.u32 2, %s24
          %s586 = ssub.s32 512, 512
          %587 = vsyncadd %s577, %s586
          %s588 = smul.addr %s584, 2
          %s589 = smul.addr %s25, 4
          %s590 = sadd.s32 %s588, %s589
          %s591 = smul.addr %s23, 4
          %s592 = sadd.s32 %s590, %s591
          %s593 = smul.addr %s592, 128
          %s594 = scalar_lea.hbm %s3, %s593
          %s595 = sshll.u32 %s580, 4
          %s596 = int_to_ptr.vmem [resolvable:$true] %s595
          %601 = dma.vmem_to_hbm [thread:$0]  %s596, 512, %s594, %s577, 256, 256, 16
        $region40: #{tpu_custom_call.1} parent=31 // pred_fallthru
          _
      $region32: #{tpu_custom_call.1} parent=5 // pred_fallthru
        _
      %p602 = scmp.le.s32.totalorder 2, %s13
      // Predicated region
      $region41: #{tpu_custom_call.1} parent=5 // pred_check
        %p603 = pneg %p602
      $region42: #{tpu_custom_call.1} parent=5 // pred_check_branch
        %605 = sbr.rel (%p603) target = $region44
      $region43: #{tpu_custom_call.1} parent=5 // pred_region
        %s606 = ssub.s32 %s13, 2
        // Predicated region
        $region45: #{tpu_custom_call.1} parent=43 // pred_check
          %p607 = pneg %p137
        $region46: #{tpu_custom_call.1} parent=43 // pred_check_branch
          %609 = sbr.rel (%p607) target = $region48
        $region47: #{tpu_custom_call.1} parent=43 // pred_region
          %s610 = sand.u32 %s122, 1
          %s611 = scalar_lea.sflag [#allocation4], %s610
          %s612 = sand.u32 %s122, 1
          %s613 = smul.addr %s612, 32
          %s614 = scalar_lea.vmem [#allocation5], %s613
          %615 = dma.done %s611, 512
        $region48: #{tpu_custom_call.1} parent=43 // pred_fallthru
          _
      $region44: #{tpu_custom_call.1} parent=5 // pred_fallthru
        _
    $region6: #{tpu_custom_call.1} parent=1 // loop_footer
      %s17 = sadd.s32 1, %s13
    $region7: #{tpu_custom_call.1} parent=1 // loop_footer_branch
      %12 = sbr.rel target = $region3
    $region8: #{tpu_custom_call.1} parent=1 // loop_exit
      _
    %616 = vsyncpa [#allocation3], 1
    %s617 = scalar_lea.sflag [#allocation3], 1
    %618 = vsyncpa %s617, 1
    %619 = vsyncpa [#allocation4], 1
    %s620 = scalar_lea.sflag [#allocation4], 1
    %621 = vsyncpa %s620, 1

</llo_original>
